<compile_context>
chip_gen: v7x
topology: tpu7x:2x2x1
jax: 0.10.0
libtpu: 0.0.40
codegen_flags: <defaults>
</compile_context>

<pallas_src>
import functools

import jax
import jax.numpy as jnp
from jax import lax
from jax.experimental import pallas as pl
from jax.experimental.pallas import tpu as pltpu


def _round_up(x, m):
    return (x + m - 1) // m * m


def _layernorm_kernel(x_ref, w_ref, b_ref, o_ref, *, eps, inv_count):
    # x_ref/o_ref: (TB, F)   w_ref/b_ref: (1, F)   F = C*N*T (full extent, no pad)
    x = x_ref[...].astype(jnp.float32)
    w = w_ref[...].astype(jnp.float32)  # (1, F) -> broadcasts over TB sublanes
    b = b_ref[...].astype(jnp.float32)

    # Single pass: accumulate sum and sum-of-squares (cross-lane reduces on XLU),
    # then biased variance via E[x^2] - mean^2, clamped against cancellation.
    s = jnp.sum(x, axis=-1, keepdims=True)        # (TB, 1)
    sq = jnp.sum(x * x, axis=-1, keepdims=True)   # (TB, 1)
    mean = s * inv_count
    var = jnp.maximum(sq * inv_count - mean * mean, 0.0)
    inv = lax.rsqrt(var + eps)

    o_ref[...] = ((x - mean) * inv * w + b).astype(o_ref.dtype)


def mtgnn_layer_norm(x, weight, bias, idx, eps=1e-5):
    """Pallas equivalent of MTGNN LayerNorm.forward(input, idx).

    x:      (B, C, N_sel, T)
    weight: (C, N_total, T)
    bias:   (C, N_total, T)
    idx:    (N_sel,) int indices into the node axis of weight/bias
    """
    B, C, N, T = x.shape
    F = C * N * T

    # Node gather stays in XLA: it is a single (C, N_sel, T) copy, negligible
    # vs the B*C*N*T streaming traffic.
    # TODO(synk): for tiny-B inference, fuse via num_scalar_prefetch=1 + per-node
    # row gather to drop this extra HBM round trip.
    w_sel = jnp.take(weight, idx, axis=1).reshape(1, F)
    b_sel = jnp.take(bias, idx, axis=1).reshape(1, F)

    # Row-major flatten only (no copy, no lane padding).
    x_f = x.reshape(B, F)

    itemsize = jnp.dtype(x.dtype).itemsize
    sub = max(8, 32 // itemsize)  # sublane quantum for this dtype (8 for f32)

    # --- generation-aware VMEM budget -------------------------------------
    try:
        vmem_cap = int(pltpu.get_tpu_info().vmem_capacity_bytes)
    except Exception:
        vmem_cap = 64 * 1024 * 1024  # conservative (v7x-sized) fallback
    target_bytes = vmem_cap // 5               # ~25 MiB on 128 MiB parts, ~12 MiB on v7x
    vmem_limit = min(vmem_cap // 2, 64 * 1024 * 1024)

    # Per sample: x in + out (double-buffered) + in-kernel f32 temporaries.
    per_sample = F * (4 * itemsize + 16)
    fixed = 2 * 2 * F * itemsize               # weight + bias VMEM buffers
    tb_max = max(1, (target_bytes - fixed) // max(per_sample, 1))

    # Pick TB: whole batch if it fits (block dim == array dim is always legal),
    # else the largest sublane-aligned divisor of B (avoids batch padding).
    if B <= tb_max:
        TB = B
    else:
        TB = 0
        t = (min(tb_max, B) // sub) * sub
        while t >= sub:
            if B % t == 0:
                TB = t
                break
            t -= sub
        if TB == 0:
            # Rare fallback: no aligned divisor fits; pad the batch instead.
            TB = max(sub, (min(tb_max, B) // sub) * sub)
    Bp = _round_up(B, TB)
    if Bp != B:
        x_f = jnp.pad(x_f, ((0, Bp - B), (0, 0)))

    kernel = functools.partial(_layernorm_kernel, eps=eps, inv_count=1.0 / float(F))

    # NOTE: weight/bias have a constant index_map so they are fetched once; left
    # at the default buffering (pl.Buffered(1) would save one F-sized buffer
    # each but is not needed for these shapes).
    out = pl.pallas_call(
        kernel,
        out_shape=jax.ShapeDtypeStruct((Bp, F), x.dtype),
        grid_spec=pltpu.PrefetchScalarGridSpec(
            num_scalar_prefetch=0,
            grid=(Bp // TB,),
            in_specs=[
                pl.BlockSpec((TB, F), lambda i: (i, 0)),
                pl.BlockSpec((1, F), lambda i: (0, 0)),
                pl.BlockSpec((1, F), lambda i: (0, 0)),
            ],
            out_specs=pl.BlockSpec((TB, F), lambda i: (i, 0)),
        ),
        compiler_params=pltpu.CompilerParams(
            dimension_semantics=("parallel",),
            vmem_limit_bytes=vmem_limit,
        ),
    )(x_f, w_sel, b_sel)

    if Bp != B:
        out = out[:B]
    return out.reshape(B, C, N, T)


def _reference_layer_norm(x, weight, bias, idx, eps=1e-5):
    # plain-JAX reference mirroring F.layer_norm over input.shape[1:]
    w_sel = jnp.take(weight, idx, axis=1)
    b_sel = jnp.take(bias, idx, axis=1)
    xf = x.astype(jnp.float32)
    mean = jnp.mean(xf, axis=(1, 2, 3), keepdims=True)
    var = jnp.mean((xf - mean) ** 2, axis=(1, 2, 3), keepdims=True)
    y = (xf - mean) / jnp.sqrt(var + eps)
    return (y * w_sel[None] + b_sel[None]).astype(x.dtype)


if __name__ == "__main__":
    key = jax.random.PRNGKey(0)
    kx, kw, kb, ki = jax.random.split(key, 4)

    # Small MTGNN-like shapes; F = C*N_sel*T = 832 is NOT a multiple of 128 so
    # the full-extent (masked-tail) last-dim path is exercised.
    B, C, N_total, N_sel, T = 4, 4, 20, 16, 13
    eps = 1e-5

    x = jax.random.normal(kx, (B, C, N_sel, T), dtype=jnp.float32)

    # Module init is ones/zeros (reset_parameters); use non-trivial deterministic
    # values so the gather + affine path is actually exercised.
    weight = 1.0 + 0.1 * jax.random.normal(kw, (C, N_total, T), dtype=jnp.float32)
    bias = 0.1 * jax.random.normal(kb, (C, N_total, T), dtype=jnp.float32)

    idx = jax.random.permutation(ki, N_total)[:N_sel].astype(jnp.int32)

    out = jax.block_until_ready(mtgnn_layer_norm(x, weight, bias, idx, eps=eps))

    ref = _reference_layer_norm(x, weight, bias, idx, eps=eps)
    assert out.shape == (B, C, N_sel, T)
    err = float(jnp.max(jnp.abs(out.astype(jnp.float32) - ref.astype(jnp.float32))))
    assert jnp.allclose(out, ref, atol=3e-5, rtol=3e-5), f"mismatch vs reference, max abs err {err}"

    print("KERNEL_OK")
</pallas_src>

<mosaic_0001>
module attributes {stable_mosaic.version = 11 : i64} {
  func.func @_layernorm_kernel(%arg0: i32, %arg1: memref<4x832xf32, #tpu.memory_space<vmem>>, %arg2: memref<1x832xf32, #tpu.memory_space<vmem>>, %arg3: memref<1x832xf32, #tpu.memory_space<vmem>>, %arg4: memref<4x832xf32, #tpu.memory_space<vmem>>) attributes {dimension_semantics = [#tpu.dimension_semantics<parallel>], iteration_bounds = array<i64: 1>, scalar_prefetch = 0 : i64, scratch_operands = 0 : i64, tpu.core_type = #tpu.core_type<tc>, window_params = [{transform_indices = @transform_0, window_bounds = array<i64: 4, 832>}, {pipeline_mode = #tpu.pipeline_mode<synchronous>, transform_indices = @transform_1, window_bounds = array<i64: 1, 832>}, {pipeline_mode = #tpu.pipeline_mode<synchronous>, transform_indices = @transform_2, window_bounds = array<i64: 1, 832>}, {transform_indices = @transform_3, window_bounds = array<i64: 4, 832>}]} {
    %c0 = arith.constant 0 : index
    %c0_0 = arith.constant 0 : index
    %0 = vector.load %arg1[%c0, %c0_0] : memref<4x832xf32, #tpu.memory_space<vmem>>, vector<4x832xf32>
    %c0_1 = arith.constant 0 : index
    %c0_2 = arith.constant 0 : index
    %1 = vector.load %arg2[%c0_1, %c0_2] : memref<1x832xf32, #tpu.memory_space<vmem>>, vector<1x832xf32>
    %c0_3 = arith.constant 0 : index
    %c0_4 = arith.constant 0 : index
    %2 = vector.load %arg3[%c0_3, %c0_4] : memref<1x832xf32, #tpu.memory_space<vmem>>, vector<1x832xf32>
    %cst = arith.constant dense<0.000000e+00> : vector<4xf32>
    %3 = vector.multi_reduction <add>, %0, %cst [1] : vector<4x832xf32> to vector<4xf32>
    %4 = vector.shape_cast %3 : vector<4xf32> to vector<4x1xf32>
    %5 = arith.mulf %0, %0 : vector<4x832xf32>
    %cst_5 = arith.constant dense<0.000000e+00> : vector<4xf32>
    %6 = vector.multi_reduction <add>, %5, %cst_5 [1] : vector<4x832xf32> to vector<4xf32>
    %7 = vector.shape_cast %6 : vector<4xf32> to vector<4x1xf32>
    %cst_6 = arith.constant 0.00120192312 : f32
    %8 = vector.broadcast %cst_6 : f32 to vector<4x1xf32>
    %9 = arith.mulf %4, %8 : vector<4x1xf32>
    %cst_7 = arith.constant 0.00120192312 : f32
    %10 = vector.broadcast %cst_7 : f32 to vector<4x1xf32>
    %11 = arith.mulf %7, %10 : vector<4x1xf32>
    %12 = arith.mulf %9, %9 : vector<4x1xf32>
    %13 = arith.subf %11, %12 : vector<4x1xf32>
    %cst_8 = arith.constant 0.000000e+00 : f32
    %14 = vector.broadcast %cst_8 : f32 to vector<4x1xf32>
    %15 = arith.maximumf %13, %14 : vector<4x1xf32>
    %cst_9 = arith.constant 9.99999974E-6 : f32
    %16 = vector.broadcast %cst_9 : f32 to vector<4x1xf32>
    %17 = arith.addf %15, %16 : vector<4x1xf32>
    %18 = math.rsqrt %17 : vector<4x1xf32>
    %19 = vector.broadcast %9 : vector<4x1xf32> to vector<4x832xf32>
    %20 = arith.subf %0, %19 : vector<4x832xf32>
    %21 = vector.broadcast %18 : vector<4x1xf32> to vector<4x832xf32>
    %22 = arith.mulf %20, %21 : vector<4x832xf32>
    %23 = vector.broadcast %1 : vector<1x832xf32> to vector<4x832xf32>
    %24 = arith.mulf %22, %23 : vector<4x832xf32>
    %25 = vector.broadcast %2 : vector<1x832xf32> to vector<4x832xf32>
    %26 = arith.addf %24, %25 : vector<4x832xf32>
    %c0_10 = arith.constant 0 : index
    %c0_11 = arith.constant 0 : index
    %27 = vector.load %arg4[%c0_10, %c0_11] : memref<4x832xf32, #tpu.memory_space<vmem>>, vector<4x832xf32>
    tpu.vector_store %arg4[%c0_10, %c0_11], %26 {strides = array<i32>} : memref<4x832xf32, #tpu.memory_space<vmem>>, vector<4x832xf32>,
    return
  }
  func.func @transform_0(%arg0: i32) -> (i32, i32) {
    %c0_i32 = arith.constant 0 : i32
    %c0_i32_0 = arith.constant 0 : i32
    return %arg0, %c0_i32 : i32, i32
  }
  func.func @transform_1(%arg0: i32) -> (i32, i32) {
    %c0_i32 = arith.constant 0 : i32
    %c0_i32_0 = arith.constant 0 : i32
    %c0_i32_1 = arith.constant 0 : i32
    return %c0_i32, %c0_i32_0 : i32, i32
  }
  func.func @transform_2(%arg0: i32) -> (i32, i32) {
    %c0_i32 = arith.constant 0 : i32
    %c0_i32_0 = arith.constant 0 : i32
    %c0_i32_1 = arith.constant 0 : i32
    return %c0_i32, %c0_i32_0 : i32, i32
  }
  func.func @transform_3(%arg0: i32) -> (i32, i32) {
    %c0_i32 = arith.constant 0 : i32
    %c0_i32_0 = arith.constant 0 : i32
    return %arg0, %c0_i32 : i32, i32
  }
}

</mosaic_0001>

<llo_original>
// kernel: tpu_custom_call.1
$region0: #{tpu_custom_call.1}
  #allocation0 [shape = 'u32[]', space=smem, size = 0x4, offset = 0x4, fixed_abs, tag = 'smem constant byte address 0x4 - core index']
  #allocation1 [shape = 'u32[144,128]{1,0:T(1,128)}', space=vmem, size = 0x12000, scoped, tag = 'internal scratch']
  %s0 = inlined_call_operand.hbm [shape: f32[4,832], index: 0, kind: input, shape index: {}]
  %s1 = inlined_call_operand.hbm [shape: f32[1,832], index: 1, kind: input, shape index: {}]
  %s2 = inlined_call_operand.vmem [shape: f32[1,832], index: 2, kind: input, shape index: {}]
  %s3 = inlined_call_operand.hbm [shape: f32[4,832], index: 3, kind: output, shape index: {}]
  %s4 = sld [smem:[#allocation0]]
  $region30: #{tpu_custom_call.1} parent=0
    _
  %s6 = ssub.s32 1, %s4
  %s7 = scalar_select 0, %s6, %s4
  $region1: #{tpu_custom_call.1} parent=0
    #allocation2 [shape = 'u8[14336]{0}', space=vmem, size = 0x3800, scoped, tag = 'input window, operand 0, single buffered']
    #allocation3 [shape = 's32[1]{0}', space=sflag, size = 0x4, scoped, tag = 'scoped memory for tpu_custom_call.1']
    #allocation4 [shape = 's32[1]{0}', space=sflag, size = 0x4, scoped, tag = 'scoped memory for tpu_custom_call.1']
    #allocation5 [shape = 'u8[3584]{0}', space=vmem, size = 0x1000, scoped, tag = 'input window, operand 1, single buffered']
    #allocation6 [shape = 's32[1]{0}', space=sflag, size = 0x4, scoped, tag = 'scoped memory for tpu_custom_call.1']
    #allocation7 [shape = 'u8[14336]{0}', space=vmem, size = 0x3800, scoped, tag = 'output window, operand 0, single buffered']
    %8 = vsyncpa [#allocation3], 0
    %9 = vsyncpa [#allocation6], 0
    %10 = vsyncpa [#allocation4], 0
    // Predicated region
    $region2: #{tpu_custom_call.1} parent=1 // pred_check
      _
    $region3: #{tpu_custom_call.1} parent=1 // pred_check_branch
      %12 = sbr.rel (0) target = $region5
    $region4: #{tpu_custom_call.1} parent=1 // pred_region
      %s14 = ssub.s32 448, 448
      %15 = vsyncadd [#allocation3], %s14
      %s17 = sshll.u32 [#allocation2], 4
      %s18 = int_to_ptr.vmem [resolvable:$true] %s17
      %20 = dma.hbm_to_vmem [thread:$0]  %s0, 448, %s18, [#allocation3]
    $region5: #{tpu_custom_call.1} parent=1 // pred_fallthru
      _
    // Predicated region
    $region6: #{tpu_custom_call.1} parent=1 // pred_check
      _
    $region7: #{tpu_custom_call.1} parent=1 // pred_check_branch
      %22 = sbr.rel (0) target = $region9
    $region8: #{tpu_custom_call.1} parent=1 // pred_region
      %s24 = ssub.s32 112, 112
      %25 = vsyncadd [#allocation6], %s24
      %s27 = sshll.u32 [#allocation5], 4
      %s28 = int_to_ptr.vmem [resolvable:$true] %s27
      %30 = dma.hbm_to_vmem [thread:$0]  %s1, 112, %s28, [#allocation6]
    $region9: #{tpu_custom_call.1} parent=1 // pred_fallthru
      _
    // Predicated region
    $region10: #{tpu_custom_call.1} parent=1 // pred_check
      _
    $region11: #{tpu_custom_call.1} parent=1 // pred_check_branch
      %32 = sbr.rel (0) target = $region13
    $region12: #{tpu_custom_call.1} parent=1 // pred_region
      _
    $region13: #{tpu_custom_call.1} parent=1 // pred_fallthru
      _
    // Predicated region
    $region14: #{tpu_custom_call.1} parent=1 // pred_check
      _
    $region15: #{tpu_custom_call.1} parent=1 // pred_check_branch
      %34 = sbr.rel (0) target = $region17
    $region16: #{tpu_custom_call.1} parent=1 // pred_region
      %35 = dma.done [#allocation3], 448
    $region17: #{tpu_custom_call.1} parent=1 // pred_fallthru
      _
    // Predicated region
    $region18: #{tpu_custom_call.1} parent=1 // pred_check
      _
    $region19: #{tpu_custom_call.1} parent=1 // pred_check_branch
      %37 = sbr.rel (0) target = $region21
    $region20: #{tpu_custom_call.1} parent=1 // pred_region
      %38 = dma.done [#allocation6], 112
    $region21: #{tpu_custom_call.1} parent=1 // pred_fallthru
      _
    %v39 = vld [vmem:[#allocation2] sm:$0xff]
    %v40 = vld [vmem:[#allocation2 + $0x8] sm:$0xff]
    %v41 = vld [vmem:[#allocation2 + $0x10] sm:$0xff]
    %v42 = vld [vmem:[#allocation2 + $0x18] sm:$0xf]
    %v43 = vld [vmem:[#allocation5] sm:$0x7f]
    %v44 = vld [vmem:[%s2] sm:$0x7f]
    %v48 = vcombine.high %v39, %v39
    %v49 = vcombine.high %v40, %v40
    %v50 = vcombine.high %v41, %v41
    %vm54 = vcmask 1043456
    %v55 = vsel %vm54, %v39, 0.0
    %v56 = vsel %vm54, %v48, 0.0
    %v57 = vadd.f32 %v55, %v56
    %v58 = vsel %vm54, %v40, 0.0
    %v59 = vadd.f32 %v57, %v58
    %v60 = vsel %vm54, %v49, 0.0
    %v61 = vadd.f32 %v59, %v60
    %v62 = vsel %vm54, %v41, 0.0
    %v63 = vadd.f32 %v61, %v62
    %v64 = vsel %vm54, %v50, 0.0
    %v65 = vadd.f32 %v63, %v64
    %vm66 = vcmask 519168
    %v67 = vsel %vm66, %v42, 0.0
    %v68 = vadd.f32 %v65, %v67
    %69 = vadd.xlane.f32.xlu0 %v68
    %v70 = vpop.xlane.xlu0 %69
    %v71 = vmul.f32 %v39, %v39
    %v72 = vmul.f32 %v40, %v40
    %v73 = vmul.f32 %v41, %v41
    %v74 = vmul.f32 %v42, %v42
    %v78 = vcombine.high %v71, %v71
    %v79 = vcombine.high %v72, %v72
    %v80 = vcombine.high %v73, %v73
    %v84 = vsel %vm54, %v71, 0.0
    %v85 = vsel %vm54, %v78, 0.0
    %v86 = vadd.f32 %v84, %v85
    %v87 = vsel %vm54, %v72, 0.0
    %v88 = vadd.f32 %v86, %v87
    %v89 = vsel %vm54, %v79, 0.0
    %v90 = vadd.f32 %v88, %v89
    %v91 = vsel %vm54, %v73, 0.0
    %v92 = vadd.f32 %v90, %v91
    %v93 = vsel %vm54, %v80, 0.0
    %v94 = vadd.f32 %v92, %v93
    %v95 = vsel %vm66, %v74, 0.0
    %v96 = vadd.f32 %v94, %v95
    %97 = vadd.xlane.f32.xlu0 %v96
    %v98 = vpop.xlane.xlu0 %97
    %v99 = vmul.f32 %v70, 0.0012019231
    %v100 = vmul.f32 %v98, 0.0012019231
    %v101 = vmul.f32 %v99, %v99
    %v102 = vsub.f32 %v100, %v101
    %v103 = vmax.f32 %v102, 0.0
    %v104 = vadd.f32 %v103, 1e-05
    %v105 = vrsqrt.pop %v104
    %v108 = vunpack.c.l.s4 839922192
    %v109 = vunpack.c.0.s8 %v108
    %v110 = vlaneseq
    %v111 = vshrl.u32 %v110, 7
    %v112 = vsub.s32 %v109, %v111
    %v113 = vrot.slane %v99, %v112
    %v115 = vsub.f32 %v39, %v113
    %v116 = vsub.f32 %v40, %v113
    %v117 = vsub.f32 %v41, %v113
    %v118 = vsub.f32 %v42, %v113
    %v121 = vunpack.c.l.s4 839922192
    %v122 = vunpack.c.0.s8 %v121
    %v123 = vlaneseq
    %v124 = vshrl.u32 %v123, 7
    %v125 = vsub.s32 %v122, %v124
    %v126 = vrot.slane %v105, %v125
    %v128 = vmul.f32 %v115, %v126
    %v129 = vmul.f32 %v116, %v126
    %v130 = vmul.f32 %v117, %v126
    %v131 = vmul.f32 %v118, %v126
    %v133 = vlaneseq
    %v134 = vshrl.u32 %v133, 7
    %v135 = vsub.s32 0, %v134
    %v136 = vrot.slane %v43, %v135
    %v137 = vlaneseq
    %v138 = vshrl.u32 %v137, 7
    %v139 = vsub.s32 1, %v138
    %v140 = vrot.slane %v43, %v139
    %v141 = vlaneseq
    %v142 = vshrl.u32 %v141, 7
    %v143 = vsub.s32 2, %v142
    %v144 = vrot.slane %v43, %v143
    %v145 = vlaneseq
    %v146 = vshrl.u32 %v145, 7
    %v147 = vsub.s32 3, %v146
    %v148 = vrot.slane %v43, %v147
    %v149 = vlaneseq
    %v150 = vshrl.u32 %v149, 7
    %v151 = vsub.s32 4, %v150
    %v152 = vrot.slane %v43, %v151
    %v153 = vlaneseq
    %v154 = vshrl.u32 %v153, 7
    %v155 = vsub.s32 5, %v154
    %v156 = vrot.slane %v43, %v155
    %v157 = vlaneseq
    %v158 = vshrl.u32 %v157, 7
    %v159 = vsub.s32 6, %v158
    %v160 = vrot.slane %v43, %v159
    %v162 = vcombine.low %v136, %v140
    %v163 = vcombine.low %v144, %v148
    %v164 = vcombine.low %v152, %v156
    %v168 = vmul.f32 %v128, %v162
    %v169 = vmul.f32 %v129, %v163
    %v170 = vmul.f32 %v130, %v164
    %v171 = vmul.f32 %v131, %v160
    %v173 = vlaneseq
    %v174 = vshrl.u32 %v173, 7
    %v175 = vsub.s32 0, %v174
    %v176 = vrot.slane %v44, %v175
    %v177 = vlaneseq
    %v178 = vshrl.u32 %v177, 7
    %v179 = vsub.s32 1, %v178
    %v180 = vrot.slane %v44, %v179
    %v181 = vlaneseq
    %v182 = vshrl.u32 %v181, 7
    %v183 = vsub.s32 2, %v182
    %v184 = vrot.slane %v44, %v183
    %v185 = vlaneseq
    %v186 = vshrl.u32 %v185, 7
    %v187 = vsub.s32 3, %v186
    %v188 = vrot.slane %v44, %v187
    %v189 = vlaneseq
    %v190 = vshrl.u32 %v189, 7
    %v191 = vsub.s32 4, %v190
    %v192 = vrot.slane %v44, %v191
    %v193 = vlaneseq
    %v194 = vshrl.u32 %v193, 7
    %v195 = vsub.s32 5, %v194
    %v196 = vrot.slane %v44, %v195
    %v197 = vlaneseq
    %v198 = vshrl.u32 %v197, 7
    %v199 = vsub.s32 6, %v198
    %v200 = vrot.slane %v44, %v199
    %v202 = vcombine.low %v176, %v180
    %v203 = vcombine.low %v184, %v188
    %v204 = vcombine.low %v192, %v196
    %v208 = vadd.f32 %v168, %v202
    %v209 = vadd.f32 %v169, %v203
    %v210 = vadd.f32 %v170, %v204
    %v211 = vadd.f32 %v171, %v200
    %212 = vst [vmem:[#allocation7] sm:$0xff] %v208
    %213 = vst [vmem:[#allocation7 + $0x8] sm:$0xff] %v209
    %214 = vst [vmem:[#allocation7 + $0x10] sm:$0xff] %v210
    %215 = vst.msk [vmem:[#allocation7 + $0x18] sm:$0xf] %vm66, %v211
    // Predicated region
    $region22: #{tpu_custom_call.1} parent=1 // pred_check
      _
    $region23: #{tpu_custom_call.1} parent=1 // pred_check_branch
      %217 = sbr.rel (0) target = $region25
    $region24: #{tpu_custom_call.1} parent=1 // pred_region
      %s219 = ssub.s32 448, 448
      %220 = vsyncadd [#allocation4], %s219
      %s222 = sshll.u32 [#allocation7], 4
      %s223 = int_to_ptr.vmem [resolvable:$true] %s222
      %225 = dma.vmem_to_hbm [thread:$0]  %s223, 448, %s3, [#allocation4]
    $region25: #{tpu_custom_call.1} parent=1 // pred_fallthru
      _
    // Predicated region
    $region26: #{tpu_custom_call.1} parent=1 // pred_check
      _
    $region27: #{tpu_custom_call.1} parent=1 // pred_check_branch
      %227 = sbr.rel (0) target = $region29
    $region28: #{tpu_custom_call.1} parent=1 // pred_region
      %228 = dma.done [#allocation4], 448
    $region29: #{tpu_custom_call.1} parent=1 // pred_fallthru
      _
    %229 = vsyncpa [#allocation3], 1
    %230 = vsyncpa [#allocation6], 1
    %231 = vsyncpa [#allocation4], 1

</llo_original>
